<compile_context>
chip_gen: v7x
topology: tpu7x:2x2x1
jax: 0.10.0
libtpu: 0.0.40
codegen_flags: <defaults>
</compile_context>

<pallas_src>
import functools

import jax
import jax.numpy as jnp
from jax.experimental import pallas as pl
from jax.experimental.pallas import tpu as pltpu

_LANE = 128
_VMEM_BLOCK_BUDGET = 24 * 1024 * 1024   # bytes for 2 inputs x 2 pipeline bufs
_VMEM_LIMIT_BYTES = 40 * 1024 * 1024    # safe on v7x (64 MiB phys); plenty on v5e/v6e
_BT_MAX = 4096                          # keep per-step DMA reasonable / grid non-trivial


def _round_up(x: int, m: int) -> int:
    return ((x + m - 1) // m) * m


def _round_down(x: int, m: int) -> int:
    return (x // m) * m


def _soft_iou_kernel(logits_ref, target_ref, out_ref,
                     inter_sc, psum_sc, tsum_sc, *, epsilon: float):
    # Grid = (batch_tiles [parallel], label_tiles [arbitrary, reduction]).
    k = pl.program_id(1)

    @pl.when(k == 0)
    def _():
        inter_sc[...] = jnp.zeros_like(inter_sc)
        psum_sc[...] = jnp.zeros_like(psum_sc)
        tsum_sc[...] = jnp.zeros_like(tsum_sc)

    logits = logits_ref[...].astype(jnp.float32)
    target = target_ref[...].astype(jnp.float32)
    probs = jax.nn.sigmoid(logits)

    # Row reductions (XLU slot).  union is recomposed from three sums instead
    # of materializing probs + target - probs*target (saves VALU work).
    inter_sc[...] += jnp.sum(probs * target, axis=1, keepdims=True)
    psum_sc[...] += jnp.sum(probs, axis=1, keepdims=True)
    tsum_sc[...] += jnp.sum(target, axis=1, keepdims=True)

    @pl.when(k == pl.num_programs(1) - 1)
    def _():
        inter = inter_sc[...] + epsilon
        union = psum_sc[...] + tsum_sc[...] - inter_sc[...] + epsilon
        # reciprocal + mul keeps the divide off the VALU slot (EUP).
        # approx=False: full precision so the f32 output matches the exact
        # reference to ~1e-6 (only bt values per block, cost is negligible).
        out_ref[...] = (1.0 - inter * pl.reciprocal(union, approx=False)
                        ).astype(out_ref.dtype)


def soft_iou_criterion(inputs: jax.Array,
                       targets: jax.Array,
                       reduction: str = "none",
                       epsilon: float = 1e-8) -> jax.Array:
    assert reduction in ("none", "mean")
    assert inputs.shape == targets.shape and inputs.ndim == 2
    batch, nb_labels = inputs.shape

    itemsize = jnp.dtype(inputs.dtype).itemsize
    sublane = {4: 8, 2: 16, 1: 32}.get(itemsize, 8)

    # ---- choose tiling against the VMEM budget -------------------------
    bytes_per_row_full = nb_labels * itemsize * 4   # 2 inputs x 2 buffers
    if bytes_per_row_full * sublane <= _VMEM_BLOCK_BUDGET:
        # Common case: whole label row in one block (reduction in-register).
        tl = nb_labels
        bt_cap = _VMEM_BLOCK_BUDGET // bytes_per_row_full
    else:
        # Very wide label rows: tile the label axis in lane multiples and
        # accumulate partial sums in VMEM scratch across the label grid.
        bt_cap = 16 * sublane
        tl = max(_LANE,
                 _round_down(_VMEM_BLOCK_BUDGET // (bt_cap * itemsize * 4),
                             _LANE))

    padded_b0 = _round_up(batch, sublane)
    bt = min(_round_down(bt_cap, sublane), _BT_MAX, padded_b0)
    bt = max(bt, sublane)
    # Keep >=2 batch grid steps when possible so v7x's two TensorCores both
    # get work (batch axis is marked "parallel").
    if padded_b0 > sublane and pl.cdiv(padded_b0, bt) < 2:
        bt = _round_up(pl.cdiv(padded_b0, 2), sublane)

    grid_b = pl.cdiv(padded_b0, bt)
    grid_l = pl.cdiv(nb_labels, tl)
    pb = grid_b * bt
    plab = grid_l * tl

    # ---- pad to full tiles (ragged batch / label handling) -------------
    # Logits padded with a large negative (sigmoid -> 0), targets with 0:
    # padded columns contribute nothing to the sums, padded rows give a
    # harmless finite loss and are sliced off below.
    if (pb, plab) != (batch, nb_labels):
        inputs = jnp.pad(inputs, ((0, pb - batch), (0, plab - nb_labels)),
                         constant_values=-1e9)
        targets = jnp.pad(targets, ((0, pb - batch), (0, plab - nb_labels)))

    loss = pl.pallas_call(
        functools.partial(_soft_iou_kernel, epsilon=float(epsilon)),
        out_shape=jax.ShapeDtypeStruct((pb, 1), jnp.float32),
        grid_spec=pltpu.PrefetchScalarGridSpec(
            num_scalar_prefetch=0,
            grid=(grid_b, grid_l),
            in_specs=[
                pl.BlockSpec((bt, tl), lambda i, k: (i, k)),
                pl.BlockSpec((bt, tl), lambda i, k: (i, k)),
            ],
            out_specs=pl.BlockSpec((bt, 1), lambda i, k: (i, 0)),
            scratch_shapes=[pltpu.VMEM((bt, 1), jnp.float32)] * 3,
        ),
        compiler_params=pltpu.CompilerParams(
            dimension_semantics=("parallel", "arbitrary"),
            vmem_limit_bytes=_VMEM_LIMIT_BYTES,
        ),
    )(inputs, targets)

    loss = loss[:batch]
    if reduction == "mean":
        # TODO(synk): could be folded into the kernel with an SMEM scalar
        # accumulator, but that forces an "arbitrary" batch axis (loses
        # megacore sharding) for a trivially small second op.
        loss = jnp.mean(loss)
    return loss


def _reference(logits, targets, epsilon=1e-8):
    probs = jax.nn.sigmoid(logits.astype(jnp.float32))
    t = targets.astype(jnp.float32)
    inter = jnp.sum(probs * t, axis=1, keepdims=True) + epsilon
    union = jnp.sum(probs + t - probs * t, axis=1, keepdims=True) + epsilon
    return 1.0 - inter / union


if __name__ == "__main__":
    key = jax.random.PRNGKey(0)

    # Case 1: aligned shapes (batch multiple of sublane, labels = 128).
    k1, k2, k3, k4 = jax.random.split(key, 4)
    b1, l1 = 8, 128
    logits1 = jax.random.normal(k1, (b1, l1), dtype=jnp.float32)
    targets1 = (jax.random.uniform(k2, (b1, l1)) > 0.5).astype(jnp.float32)

    out1 = jax.block_until_ready(
        soft_iou_criterion(logits1, targets1, reduction="none"))
    out1_mean = jax.block_until_ready(
        soft_iou_criterion(logits1, targets1, reduction="mean"))
    ref1 = _reference(logits1, targets1)
    assert out1.shape == (b1, 1)
    assert jnp.allclose(out1, ref1, atol=1e-5)
    assert jnp.allclose(out1_mean, jnp.mean(ref1), atol=1e-5)

    # Case 2: ragged batch and non-multiple-of-128 label count.
    b2, l2 = 10, 300
    logits2 = jax.random.normal(k3, (b2, l2), dtype=jnp.float32)
    targets2 = (jax.random.uniform(k4, (b2, l2)) > 0.5).astype(jnp.float32)

    out2 = jax.block_until_ready(
        soft_iou_criterion(logits2, targets2, reduction="none"))
    out2_mean = jax.block_until_ready(
        soft_iou_criterion(logits2, targets2, reduction="mean"))
    ref2 = _reference(logits2, targets2)
    assert out2.shape == (b2, 1)
    assert jnp.allclose(out2, ref2, atol=1e-5)
    assert jnp.allclose(out2_mean, jnp.mean(ref2), atol=1e-5)

    print("KERNEL_OK")
</pallas_src>

<mosaic_0001>
module attributes {stable_mosaic.version = 11 : i64} {
  func.func @_soft_iou_kernel(%arg0: i32, %arg1: i32, %arg2: memref<8x128xf32, #tpu.memory_space<vmem>>, %arg3: memref<8x128xf32, #tpu.memory_space<vmem>>, %arg4: memref<8x1xf32, #tpu.memory_space<vmem>>, %arg5: memref<8x1xf32, #tpu.memory_space<vmem>>, %arg6: memref<8x1xf32, #tpu.memory_space<vmem>>, %arg7: memref<8x1xf32, #tpu.memory_space<vmem>>) attributes {dimension_semantics = [#tpu.dimension_semantics<parallel>, #tpu.dimension_semantics<arbitrary>], iteration_bounds = array<i64: 1, 1>, scalar_prefetch = 0 : i64, scratch_operands = 3 : i64, tpu.core_type = #tpu.core_type<tc>, window_params = [{transform_indices = @transform_0, window_bounds = array<i64: 8, 128>}, {transform_indices = @transform_1, window_bounds = array<i64: 8, 128>}, {transform_indices = @transform_2, window_bounds = array<i64: 8, 1>}]} {
    %c0_i32 = arith.constant 0 : i32
    %0 = arith.cmpi eq, %arg1, %c0_i32 : i32
    %1 = arith.extui %0 : i1 to i32
    %c0_i32_0 = arith.constant 0 : i32
    %2 = arith.cmpi ne, %1, %c0_i32_0 : i32
    scf.if %2 {
      %cst_21 = arith.constant 0.000000e+00 : f32
      %29 = vector.broadcast %cst_21 : f32 to vector<8x1xf32>
      %c0_22 = arith.constant 0 : index
      %c0_23 = arith.constant 0 : index
      %30 = vector.load %arg5[%c0_22, %c0_23] : memref<8x1xf32, #tpu.memory_space<vmem>>, vector<8x1xf32>
      tpu.vector_store %arg5[%c0_22, %c0_23], %29 {strides = array<i32>} : memref<8x1xf32, #tpu.memory_space<vmem>>, vector<8x1xf32>,
      %cst_24 = arith.constant 0.000000e+00 : f32
      %31 = vector.broadcast %cst_24 : f32 to vector<8x1xf32>
      %c0_25 = arith.constant 0 : index
      %c0_26 = arith.constant 0 : index
      %32 = vector.load %arg6[%c0_25, %c0_26] : memref<8x1xf32, #tpu.memory_space<vmem>>, vector<8x1xf32>
      tpu.vector_store %arg6[%c0_25, %c0_26], %31 {strides = array<i32>} : memref<8x1xf32, #tpu.memory_space<vmem>>, vector<8x1xf32>,
      %cst_27 = arith.constant 0.000000e+00 : f32
      %33 = vector.broadcast %cst_27 : f32 to vector<8x1xf32>
      %c0_28 = arith.constant 0 : index
      %c0_29 = arith.constant 0 : index
      %34 = vector.load %arg7[%c0_28, %c0_29] : memref<8x1xf32, #tpu.memory_space<vmem>>, vector<8x1xf32>
      tpu.vector_store %arg7[%c0_28, %c0_29], %33 {strides = array<i32>} : memref<8x1xf32, #tpu.memory_space<vmem>>, vector<8x1xf32>,
    } else {
    }
    %c0 = arith.constant 0 : index
    %c0_1 = arith.constant 0 : index
    %3 = vector.load %arg2[%c0, %c0_1] : memref<8x128xf32, #tpu.memory_space<vmem>>, vector<8x128xf32>
    %c0_2 = arith.constant 0 : index
    %c0_3 = arith.constant 0 : index
    %4 = vector.load %arg3[%c0_2, %c0_3] : memref<8x128xf32, #tpu.memory_space<vmem>>, vector<8x128xf32>
    %5 = arith.negf %3 : vector<8x128xf32>
    %6 = math.exp %5 : vector<8x128xf32>
    %cst = arith.constant 1.000000e+00 : f32
    %7 = vector.broadcast %cst : f32 to vector<8x128xf32>
    %8 = arith.addf %7, %6 : vector<8x128xf32>
    %9 = arith.divf %7, %8 : vector<8x128xf32>
    %c0_4 = arith.constant 0 : index
    %c0_5 = arith.constant 0 : index
    %10 = vector.load %arg5[%c0_4, %c0_5] : memref<8x1xf32, #tpu.memory_space<vmem>>, vector<8x1xf32>
    %11 = arith.mulf %9, %4 : vector<8x128xf32>
    %cst_6 = arith.constant dense<0.000000e+00> : vector<8xf32>
    %12 = vector.multi_reduction <add>, %11, %cst_6 [1] : vector<8x128xf32> to vector<8xf32>
    %13 = vector.shape_cast %12 : vector<8xf32> to vector<8x1xf32>
    %14 = arith.addf %10, %13 : vector<8x1xf32>
    %c0_7 = arith.constant 0 : index
    %c0_8 = arith.constant 0 : index
    %15 = vector.load %arg5[%c0_7, %c0_8] : memref<8x1xf32, #tpu.memory_space<vmem>>, vector<8x1xf32>
    tpu.vector_store %arg5[%c0_7, %c0_8], %14 {strides = array<i32>} : memref<8x1xf32, #tpu.memory_space<vmem>>, vector<8x1xf32>,
    %c0_9 = arith.constant 0 : index
    %c0_10 = arith.constant 0 : index
    %16 = vector.load %arg6[%c0_9, %c0_10] : memref<8x1xf32, #tpu.memory_space<vmem>>, vector<8x1xf32>
    %cst_11 = arith.constant dense<0.000000e+00> : vector<8xf32>
    %17 = vector.multi_reduction <add>, %9, %cst_11 [1] : vector<8x128xf32> to vector<8xf32>
    %18 = vector.shape_cast %17 : vector<8xf32> to vector<8x1xf32>
    %19 = arith.addf %16, %18 : vector<8x1xf32>
    %c0_12 = arith.constant 0 : index
    %c0_13 = arith.constant 0 : index
    %20 = vector.load %arg6[%c0_12, %c0_13] : memref<8x1xf32, #tpu.memory_space<vmem>>, vector<8x1xf32>
    tpu.vector_store %arg6[%c0_12, %c0_13], %19 {strides = array<i32>} : memref<8x1xf32, #tpu.memory_space<vmem>>, vector<8x1xf32>,
    %c0_14 = arith.constant 0 : index
    %c0_15 = arith.constant 0 : index
    %21 = vector.load %arg7[%c0_14, %c0_15] : memref<8x1xf32, #tpu.memory_space<vmem>>, vector<8x1xf32>
    %cst_16 = arith.constant dense<0.000000e+00> : vector<8xf32>
    %22 = vector.multi_reduction <add>, %4, %cst_16 [1] : vector<8x128xf32> to vector<8xf32>
    %23 = vector.shape_cast %22 : vector<8xf32> to vector<8x1xf32>
    %24 = arith.addf %21, %23 : vector<8x1xf32>
    %c0_17 = arith.constant 0 : index
    %c0_18 = arith.constant 0 : index
    %25 = vector.load %arg7[%c0_17, %c0_18] : memref<8x1xf32, #tpu.memory_space<vmem>>, vector<8x1xf32>
    tpu.vector_store %arg7[%c0_17, %c0_18], %24 {strides = array<i32>} : memref<8x1xf32, #tpu.memory_space<vmem>>, vector<8x1xf32>,
    %c0_i32_19 = arith.constant 0 : i32
    %26 = arith.cmpi eq, %arg1, %c0_i32_19 : i32
    %27 = arith.extui %26 : i1 to i32
    %c0_i32_20 = arith.constant 0 : i32
    %28 = arith.cmpi ne, %27, %c0_i32_20 : i32
    scf.if %28 {
      %c0_21 = arith.constant 0 : index
      %c0_22 = arith.constant 0 : index
      %29 = vector.load %arg5[%c0_21, %c0_22] : memref<8x1xf32, #tpu.memory_space<vmem>>, vector<8x1xf32>
      %cst_23 = arith.constant 9.99999993E-9 : f32
      %30 = vector.broadcast %cst_23 : f32 to vector<8x1xf32>
      %31 = arith.addf %29, %30 : vector<8x1xf32>
      %c0_24 = arith.constant 0 : index
      %c0_25 = arith.constant 0 : index
      %32 = vector.load %arg6[%c0_24, %c0_25] : memref<8x1xf32, #tpu.memory_space<vmem>>, vector<8x1xf32>
      %c0_26 = arith.constant 0 : index
      %c0_27 = arith.constant 0 : index
      %33 = vector.load %arg7[%c0_26, %c0_27] : memref<8x1xf32, #tpu.memory_space<vmem>>, vector<8x1xf32>
      %34 = arith.addf %32, %33 : vector<8x1xf32>
      %c0_28 = arith.constant 0 : index
      %c0_29 = arith.constant 0 : index
      %35 = vector.load %arg5[%c0_28, %c0_29] : memref<8x1xf32, #tpu.memory_space<vmem>>, vector<8x1xf32>
      %36 = arith.subf %34, %35 : vector<8x1xf32>
      %cst_30 = arith.constant 9.99999993E-9 : f32
      %37 = vector.broadcast %cst_30 : f32 to vector<8x1xf32>
      %38 = arith.addf %36, %37 : vector<8x1xf32>
      %39 = tpu.reciprocal %38 : vector<8x1xf32> -> vector<8x1xf32>
      %40 = arith.mulf %31, %39 : vector<8x1xf32>
      %cst_31 = arith.constant 1.000000e+00 : f32
      %41 = vector.broadcast %cst_31 : f32 to vector<8x1xf32>
      %42 = arith.subf %41, %40 : vector<8x1xf32>
      %c0_32 = arith.constant 0 : index
      %c0_33 = arith.constant 0 : index
      %43 = vector.load %arg4[%c0_32, %c0_33] : memref<8x1xf32, #tpu.memory_space<vmem>>, vector<8x1xf32>
      tpu.vector_store %arg4[%c0_32, %c0_33], %42 {strides = array<i32>} : memref<8x1xf32, #tpu.memory_space<vmem>>, vector<8x1xf32>,
    } else {
    }
    return
  }
  func.func @transform_0(%arg0: i32, %arg1: i32) -> (i32, i32) {
    %c0_i32 = arith.constant 0 : i32
    return %arg0, %arg1 : i32, i32
  }
  func.func @transform_1(%arg0: i32, %arg1: i32) -> (i32, i32) {
    %c0_i32 = arith.constant 0 : i32
    return %arg0, %arg1 : i32, i32
  }
  func.func @transform_2(%arg0: i32, %arg1: i32) -> (i32, i32) {
    %c0_i32 = arith.constant 0 : i32
    %c0_i32_0 = arith.constant 0 : i32
    return %arg0, %c0_i32 : i32, i32
  }
}

</mosaic_0001>

<llo_original>
// kernel: tpu_custom_call.1
$region0: #{tpu_custom_call.1}
  #allocation0 [shape = 'u32[]', space=smem, size = 0x4, offset = 0x4, fixed_abs, tag = 'smem constant byte address 0x4 - core index']
  #allocation1 [shape = 'u32[144,128]{1,0:T(1,128)}', space=vmem, size = 0x12000, scoped, tag = 'internal scratch']
  #allocation2 [shape = 'f32[8,1]{1,0:T(8,128)}', space=vmem, size = 0x1000, scoped, tag = 'scratch operand']
  #allocation3 [shape = 'f32[8,1]{1,0:T(8,128)}', space=vmem, size = 0x1000, scoped, tag = 'scratch operand']
  #allocation4 [shape = 'f32[8,1]{1,0:T(8,128)}', space=vmem, size = 0x1000, scoped, tag = 'scratch operand']
  %s0 = inlined_call_operand.hbm [shape: f32[8,128], index: 0, kind: input, shape index: {}]
  %s1 = inlined_call_operand.hbm [shape: f32[8,128], index: 1, kind: input, shape index: {}]
  %s2 = inlined_call_operand.vmem [shape: f32[8,1], index: 2, kind: output, shape index: {}]
  %s3 = sld [smem:[#allocation0]]
  $region34: #{tpu_custom_call.1} parent=0
    _
  %s5 = ssub.s32 1, %s3
  %s6 = scalar_select 0, %s5, %s3
  $region1: #{tpu_custom_call.1} parent=0
    #allocation5 [shape = 'u8[4096]{0}', space=vmem, size = 0x1000, scoped, tag = 'input window, operand 0, single buffered']
    #allocation6 [shape = 's32[1]{0}', space=sflag, size = 0x4, scoped, tag = 'scoped memory for tpu_custom_call.1']
    #allocation7 [shape = 'u8[4096]{0}', space=vmem, size = 0x1000, scoped, tag = 'input window, operand 1, single buffered']
    #allocation8 [shape = 's32[1]{0}', space=sflag, size = 0x4, scoped, tag = 'scoped memory for tpu_custom_call.1']
    %7 = vsyncpa [#allocation6], 0
    %8 = vsyncpa [#allocation8], 0
    // Predicated region
    $region2: #{tpu_custom_call.1} parent=1 // pred_check
      _
    $region3: #{tpu_custom_call.1} parent=1 // pred_check_branch
      %10 = sbr.rel (0) target = $region5
    $region4: #{tpu_custom_call.1} parent=1 // pred_region
      %s12 = ssub.s32 128, 128
      %13 = vsyncadd [#allocation6], %s12
      %s15 = sshll.u32 [#allocation5], 4
      %s16 = int_to_ptr.vmem [resolvable:$true] %s15
      %18 = dma.hbm_to_vmem [thread:$0]  %s0, 128, %s16, [#allocation6]
    $region5: #{tpu_custom_call.1} parent=1 // pred_fallthru
      _
    // Predicated region
    $region6: #{tpu_custom_call.1} parent=1 // pred_check
      _
    $region7: #{tpu_custom_call.1} parent=1 // pred_check_branch
      %20 = sbr.rel (0) target = $region9
    $region8: #{tpu_custom_call.1} parent=1 // pred_region
      %s22 = ssub.s32 128, 128
      %23 = vsyncadd [#allocation8], %s22
      %s25 = sshll.u32 [#allocation7], 4
      %s26 = int_to_ptr.vmem [resolvable:$true] %s25
      %28 = dma.hbm_to_vmem [thread:$0]  %s1, 128, %s26, [#allocation8]
    $region9: #{tpu_custom_call.1} parent=1 // pred_fallthru
      _
    // Predicated region
    $region10: #{tpu_custom_call.1} parent=1 // pred_check
      _
    $region11: #{tpu_custom_call.1} parent=1 // pred_check_branch
      %30 = sbr.rel (0) target = $region13
    $region12: #{tpu_custom_call.1} parent=1 // pred_region
      %31 = dma.done [#allocation6], 128
    $region13: #{tpu_custom_call.1} parent=1 // pred_fallthru
      _
    // Predicated region
    $region14: #{tpu_custom_call.1} parent=1 // pred_check
      _
    $region15: #{tpu_custom_call.1} parent=1 // pred_check_branch
      %33 = sbr.rel (0) target = $region17
    $region16: #{tpu_custom_call.1} parent=1 // pred_region
      %34 = dma.done [#allocation8], 128
    $region17: #{tpu_custom_call.1} parent=1 // pred_fallthru
      _
    %p35 = scmp.eq.s32.totalorder 0, 0
    // Predicated region
    $region18: #{tpu_custom_call.1} parent=1 // pred_check
      %p36 = pneg %p35
    $region19: #{tpu_custom_call.1} parent=1 // pred_check_branch
      %38 = sbr.rel (%p36) target = $region21
    $region20: #{tpu_custom_call.1} parent=1 // pred_region
      %vm39 = vcmask 7168
      %40 = vst.msk [vmem:[#allocation2] sm:$0xff] %vm39, 0.0
      %41 = vst.msk [vmem:[#allocation3] sm:$0xff] %vm39, 0.0
      %42 = vst.msk [vmem:[#allocation4] sm:$0xff] %vm39, 0.0
    $region21: #{tpu_custom_call.1} parent=1 // pred_fallthru
      _
    %v43 = vld [vmem:[#allocation5] sm:$0xff]
    %v44 = vld [vmem:[#allocation7] sm:$0xff]
    %v45 = vxor.u32 %v43, 2147483648
    %v46 = vmul.f32 %v45, 1.442695
    %v47 = vpow.pop %v46
    %v48 = vadd.f32 %v47, 1.0
    %v49 = vrcp.pop %v48
    %v50 = vmul.f32 1.0, %v49
    %v51 = vld [vmem:[#allocation2] sm:$0xff]
    %v52 = vmul.f32 %v50, %v44
    %53 = vadd.xlane.f32.xlu0 %v52
    %v54 = vpop.xlane.xlu0 %53
    %v55 = vadd.f32 %v51, %v54
    %vm56 = vcmask 7168
    %57 = vst.msk [vmem:[#allocation2] sm:$0xff] %vm56, %v55
    %v58 = vld [vmem:[#allocation3] sm:$0xff]
    %59 = vadd.xlane.f32.xlu0 %v50
    %v60 = vpop.xlane.xlu0 %59
    %v61 = vadd.f32 %v58, %v60
    %62 = vst.msk [vmem:[#allocation3] sm:$0xff] %vm56, %v61
    %v63 = vld [vmem:[#allocation4] sm:$0xff]
    %64 = vadd.xlane.f32.xlu0 %v44
    %v65 = vpop.xlane.xlu0 %64
    %v66 = vadd.f32 %v63, %v65
    %67 = vst.msk [vmem:[#allocation4] sm:$0xff] %vm56, %v66
    // Predicated region
    $region22: #{tpu_custom_call.1} parent=1 // pred_check
      %p68 = pneg %p35
    $region23: #{tpu_custom_call.1} parent=1 // pred_check_branch
      %70 = sbr.rel (%p68) target = $region25
    $region24: #{tpu_custom_call.1} parent=1 // pred_region
      %v71 = vld [vmem:[#allocation2] sm:$0xff]
      %v72 = vadd.f32 %v71, 1e-08
      %v73 = vld [vmem:[#allocation3] sm:$0xff]
      %v74 = vld [vmem:[#allocation4] sm:$0xff]
      %v75 = vadd.f32 %v73, %v74
      %v76 = vsub.f32 %v75, %v71
      %v77 = vadd.f32 %v76, 1e-08
      %v78 = vrcp.pop %v77
      %v79 = vmul.f32 %v72, %v78
      %v80 = vsub.f32 1.0, %v79
      %81 = vst.msk [vmem:[%s2] sm:$0xff] %vm56, %v80
    $region25: #{tpu_custom_call.1} parent=1 // pred_fallthru
      _
    // Predicated region
    $region26: #{tpu_custom_call.1} parent=1 // pred_check
      _
    $region27: #{tpu_custom_call.1} parent=1 // pred_check_branch
      %83 = sbr.rel (0) target = $region29
    $region28: #{tpu_custom_call.1} parent=1 // pred_region
      _
    $region29: #{tpu_custom_call.1} parent=1 // pred_fallthru
      _
    // Predicated region
    $region30: #{tpu_custom_call.1} parent=1 // pred_check
      _
    $region31: #{tpu_custom_call.1} parent=1 // pred_check_branch
      %85 = sbr.rel (0) target = $region33
    $region32: #{tpu_custom_call.1} parent=1 // pred_region
      _
    $region33: #{tpu_custom_call.1} parent=1 // pred_fallthru
      _
    %86 = vsyncpa [#allocation6], 1
    %87 = vsyncpa [#allocation8], 1

</llo_original>
